<compile_context>
chip_gen: v6e
topology: v6e:2x2x1
jax: 0.10.0
libtpu: 0.0.40
codegen_flags: <defaults>
</compile_context>

<pallas_src>
import numpy as np
import jax
import jax.numpy as jnp
from jax.experimental import pallas as pl
from jax.experimental.pallas import tpu as pltpu


# ---------------------------------------------------------------------------
# Parameter setup (mirrors PositionEncoding.__init__ + the pad logic in forward)
# ---------------------------------------------------------------------------
def make_sinusoid_table(n_position: int, d_hid: int) -> np.ndarray:
    """Matches _get_sinusoid_encoding_table: shape (1, n_position, d_hid)."""
    pos = np.arange(n_position, dtype=np.float64)[:, None]
    hid = np.arange(d_hid)[None, :]
    table = pos / np.power(10000.0, 2.0 * (hid // 2) / d_hid)
    table[:, 0::2] = np.sin(table[:, 0::2])
    table[:, 1::2] = np.cos(table[:, 1::2])
    return table.astype(np.float32)[None]  # (1, n_position, d_hid)


def pad_positions_to(table: np.ndarray, desired_dim: int = 64) -> np.ndarray:
    """Mirrors F.pad(pos_table, (0, 0, left_pad, right_pad)).

    F.pad pads the *second-to-last* axis (positions) by (left_pad, right_pad);
    negative pads crop, exactly like torch.
    """
    n = table.shape[1]
    pad_length = desired_dim - n
    left = pad_length // 2          # python floor-div, same as the torch code
    right = pad_length - left
    # crop for negative amounts
    start = max(0, -left)
    end = n - max(0, -right)
    cropped = table[:, start:end, :]
    # pad for positive amounts
    pad_l, pad_r = max(0, left), max(0, right)
    return np.pad(cropped, ((0, 0), (pad_l, pad_r), (0, 0)))


# ---------------------------------------------------------------------------
# Pallas kernel: out[b, f] = x[b, f] + pe[0, f]   (f = flattened s*D + d)
# ---------------------------------------------------------------------------
def add_pos_encoding_kernel(x_ref, pe_ref, o_ref):
    # x_ref: (B, S*D), pe_ref: (1, S*D) -> sublane-broadcast add, lane-dense.
    o_ref[...] = x_ref[...] + pe_ref[...]


def position_encoding_forward(x: jax.Array, pos_table_padded: jax.Array) -> jax.Array:
    """x: (B, S, D); pos_table_padded: (1, 64, D). Returns x + table[:, :S]."""
    B, S, D = x.shape
    if S > pos_table_padded.shape[1]:
        # Mirrors the torch module, which would also fail (shape mismatch) here.
        raise ValueError(
            f"sequence length {S} exceeds padded table length "
            f"{pos_table_padded.shape[1]}")

    # Lane-dense presentation: flatten (S, D) -> S*D lanes (256 here, a
    # multiple of 128).  Plain-JAX glue; free reshapes at the XLA level.
    x2 = x.reshape(B, S * D)                              # (B, S*D)
    pe = pos_table_padded[:, :S, :].reshape(1, S * D)     # (1, S*D)

    out2 = pl.pallas_call(
        add_pos_encoding_kernel,
        out_shape=jax.ShapeDtypeStruct((B, S * D), x.dtype),
        # No grid: the whole 2 KiB payload is a single block / single step.
        in_specs=[
            pl.BlockSpec((B, S * D), lambda: (0, 0)),
            pl.BlockSpec((1, S * D), lambda: (0, 0)),
        ],
        out_specs=pl.BlockSpec((B, S * D), lambda: (0, 0)),
    )(x2, pe)

    return out2.reshape(B, S, D)


# ---------------------------------------------------------------------------
if __name__ == "__main__":
    d_hid = 32
    n_position = 100   # torch default; forward crops positions 18..81 to length 64
    B, S = 2, 8

    # Deterministic "buffer" (the registered pos_table) + padded version.
    pos_table = make_sinusoid_table(n_position, d_hid)         # (1, 100, 32)
    pos_table_padded = pad_positions_to(pos_table, 64)         # (1, 64, 32)
    pos_table_padded_j = jnp.asarray(pos_table_padded)

    # Deterministic input.
    key = jax.random.PRNGKey(0)
    x = jax.random.normal(key, (B, S, d_hid), dtype=jnp.float32)

    out = position_encoding_forward(x, pos_table_padded_j)
    out = jax.block_until_ready(out)

    # Sanity check against a pure-JAX reference of the same semantics.
    ref = x + pos_table_padded_j[:, :S, :]
    assert out.shape == (B, S, d_hid)
    np.testing.assert_allclose(np.asarray(out), np.asarray(ref), rtol=1e-6, atol=1e-6)

    print("KERNEL_OK")
</pallas_src>

<mosaic_0001>
module attributes {stable_mosaic.version = 11 : i64} {
  func.func @add_pos_encoding_kernel(%arg0: memref<2x256xf32, #tpu.memory_space<vmem>>, %arg1: memref<1x256xf32, #tpu.memory_space<vmem>>, %arg2: memref<2x256xf32, #tpu.memory_space<vmem>>) attributes {dimension_semantics = [], scalar_prefetch = 0 : i64, scratch_operands = 0 : i64, tpu.core_type = #tpu.core_type<tc>} {
    %c0 = arith.constant 0 : index
    %c0_0 = arith.constant 0 : index
    %0 = vector.load %arg0[%c0, %c0_0] : memref<2x256xf32, #tpu.memory_space<vmem>>, vector<2x256xf32>
    %c0_1 = arith.constant 0 : index
    %c0_2 = arith.constant 0 : index
    %1 = vector.load %arg1[%c0_1, %c0_2] : memref<1x256xf32, #tpu.memory_space<vmem>>, vector<1x256xf32>
    %2 = vector.broadcast %1 : vector<1x256xf32> to vector<2x256xf32>
    %3 = arith.addf %0, %2 : vector<2x256xf32>
    %c0_3 = arith.constant 0 : index
    %c0_4 = arith.constant 0 : index
    %4 = vector.load %arg2[%c0_3, %c0_4] : memref<2x256xf32, #tpu.memory_space<vmem>>, vector<2x256xf32>
    tpu.vector_store %arg2[%c0_3, %c0_4], %3 {strides = array<i32>} : memref<2x256xf32, #tpu.memory_space<vmem>>, vector<2x256xf32>,
    return
  }
}

</mosaic_0001>

<llo_original>
// kernel: tpu_custom_call.1
$region0: #{tpu_custom_call.1}
  #allocation0 [shape = 'u32[]', space=smem, size = 0x4, offset = 0x4, fixed_abs, tag = 'smem constant byte address 0x4 - core index']
  #allocation1 [shape = 'u32[144,128]{1,0:T(1,128)}', space=vmem, size = 0x12000, scoped, tag = 'internal scratch']
  %s0 = inlined_call_operand.hbm [shape: f32[2,256], index: 0, kind: input, shape index: {}]
  %s1 = inlined_call_operand.hbm [shape: f32[1,256], index: 1, kind: input, shape index: {}]
  %s2 = inlined_call_operand.hbm [shape: f32[2,256], index: 2, kind: output, shape index: {}]
  %s3 = sld [smem:[#allocation0]]
  $region26: #{tpu_custom_call.1} parent=0
    _
  %s5 = ssub.s32 1, %s3
  %s6 = scalar_select 0, %s5, %s3
  $region1: #{tpu_custom_call.1} parent=0
    #allocation2 [shape = 'u8[2048]{0}', space=vmem, size = 0x800, scoped, tag = 'input window, operand 0, single buffered']
    #allocation3 [shape = 's32[1]{0}', space=sflag, size = 0x4, scoped, tag = 'scoped memory for tpu_custom_call.1']
    #allocation4 [shape = 's32[1]{0}', space=sflag, size = 0x4, scoped, tag = 'scoped memory for tpu_custom_call.1']
    #allocation5 [shape = 'u8[1024]{0}', space=vmem, size = 0x400, scoped, tag = 'input window, operand 1, single buffered']
    #allocation6 [shape = 's32[1]{0}', space=sflag, size = 0x4, scoped, tag = 'scoped memory for tpu_custom_call.1']
    #allocation7 [shape = 'u8[2048]{0}', space=vmem, size = 0x800, scoped, tag = 'output window, operand 0, single buffered']
    %7 = vsyncpa [#allocation3], 0
    %8 = vsyncpa [#allocation6], 0
    %9 = vsyncpa [#allocation4], 0
    // Predicated region
    $region2: #{tpu_custom_call.1} parent=1 // pred_check
      _
    $region3: #{tpu_custom_call.1} parent=1 // pred_check_branch
      %11 = sbr.rel (0) target = $region5
    $region4: #{tpu_custom_call.1} parent=1 // pred_region
      %s13 = ssub.s32 64, 64
      %14 = vsyncadd [#allocation3], %s13
      %s16 = sshll.u32 [#allocation2], 4
      %s17 = int_to_ptr.vmem [resolvable:$true] %s16
      %19 = dma.hbm_to_vmem [thread:$0]  %s0, 64, %s17, [#allocation3]
    $region5: #{tpu_custom_call.1} parent=1 // pred_fallthru
      _
    // Predicated region
    $region6: #{tpu_custom_call.1} parent=1 // pred_check
      _
    $region7: #{tpu_custom_call.1} parent=1 // pred_check_branch
      %21 = sbr.rel (0) target = $region9
    $region8: #{tpu_custom_call.1} parent=1 // pred_region
      %s23 = ssub.s32 32, 32
      %24 = vsyncadd [#allocation6], %s23
      %s26 = sshll.u32 [#allocation5], 4
      %s27 = int_to_ptr.vmem [resolvable:$true] %s26
      %29 = dma.hbm_to_vmem [thread:$0]  %s1, 32, %s27, [#allocation6]
    $region9: #{tpu_custom_call.1} parent=1 // pred_fallthru
      _
    // Predicated region
    $region10: #{tpu_custom_call.1} parent=1 // pred_check
      _
    $region11: #{tpu_custom_call.1} parent=1 // pred_check_branch
      %31 = sbr.rel (0) target = $region13
    $region12: #{tpu_custom_call.1} parent=1 // pred_region
      %32 = dma.done [#allocation3], 64
    $region13: #{tpu_custom_call.1} parent=1 // pred_fallthru
      _
    // Predicated region
    $region14: #{tpu_custom_call.1} parent=1 // pred_check
      _
    $region15: #{tpu_custom_call.1} parent=1 // pred_check_branch
      %34 = sbr.rel (0) target = $region17
    $region16: #{tpu_custom_call.1} parent=1 // pred_region
      %35 = dma.done [#allocation6], 32
    $region17: #{tpu_custom_call.1} parent=1 // pred_fallthru
      _
    %v36 = vld [vmem:[#allocation2] sm:$0xf]
    %v37 = vld [vmem:[#allocation5] sm:$0x3]
    %v39 = vlaneseq
    %v40 = vshrl.u32 %v39, 7
    %v41 = vsub.s32 0, %v40
    %v42 = vrot.slane %v37, %v41
    %v43 = vlaneseq
    %v44 = vshrl.u32 %v43, 7
    %v45 = vsub.s32 1, %v44
    %v46 = vrot.slane %v37, %v45
    %v47 = vcombine.low %v42, %v46
    %v49 = vunpack.c.l.s4 1983009808
    %v50 = vunpack.c.0.s8 %v49
    %v51 = vlaneseq
    %v52 = vshrl.u32 %v51, 7
    %v53 = vsub.s32 %v50, %v52
    %v54 = vrot.slane %v47, %v53
    %v56 = vadd.f32 %v36, %v54
    %57 = vst [vmem:[#allocation7] sm:$0xf] %v56
    // Predicated region
    $region18: #{tpu_custom_call.1} parent=1 // pred_check
      _
    $region19: #{tpu_custom_call.1} parent=1 // pred_check_branch
      %59 = sbr.rel (0) target = $region21
    $region20: #{tpu_custom_call.1} parent=1 // pred_region
      %s61 = ssub.s32 64, 64
      %62 = vsyncadd [#allocation4], %s61
      %s64 = sshll.u32 [#allocation7], 4
      %s65 = int_to_ptr.vmem [resolvable:$true] %s64
      %67 = dma.vmem_to_hbm [thread:$0]  %s65, 64, %s2, [#allocation4]
    $region21: #{tpu_custom_call.1} parent=1 // pred_fallthru
      _
    // Predicated region
    $region22: #{tpu_custom_call.1} parent=1 // pred_check
      _
    $region23: #{tpu_custom_call.1} parent=1 // pred_check_branch
      %69 = sbr.rel (0) target = $region25
    $region24: #{tpu_custom_call.1} parent=1 // pred_region
      %70 = dma.done [#allocation4], 64
    $region25: #{tpu_custom_call.1} parent=1 // pred_fallthru
      _
    %71 = vsyncpa [#allocation3], 1
    %72 = vsyncpa [#allocation6], 1
    %73 = vsyncpa [#allocation4], 1

</llo_original>
